<compile_context>
chip_gen: v6e
topology: v6e:2x2x1
jax: 0.10.0
libtpu: 0.0.40
codegen_flags: <defaults>
</compile_context>

<pallas_src>
import functools

import jax
import jax.numpy as jnp
from jax.experimental import pallas as pl
from jax.experimental.pallas import tpu as pltpu


# --------------------------------------------------------------------------
# Kernels
# --------------------------------------------------------------------------
def _ca_fused_kernel(x_ref, w1t_ref, w2t_ref, o_ref, *, hw):
    """Single pass: pool + fused MLP + sigmoid + scale on one batch tile."""
    x = x_ref[...]                                           # (bt, C, HW)
    bt = x.shape[0]

    # Pooling over the full (unpadded) spatial axis.  Mean accumulates in
    # f32; max is exact in the native dtype.  Only (bt, C) results are cast.
    avg = jnp.sum(x, axis=-1, dtype=jnp.float32) * (1.0 / hw)   # (bt, C)
    mx = jnp.max(x, axis=-1).astype(jnp.float32)                # (bt, C)

    # One fused MLP for both pooled branches (halves the matmul count).
    pooled = jnp.concatenate([avg, mx], axis=0)                 # (2*bt, C)
    h = jnp.maximum(
        jnp.dot(pooled, w1t_ref[...], preferred_element_type=jnp.float32), 0.0)
    logits = jnp.dot(h, w2t_ref[...], preferred_element_type=jnp.float32)
    attn = jax.nn.sigmoid(logits[:bt] + logits[bt:])            # (bt, C) f32

    if o_ref.dtype == jnp.float32:
        o_ref[...] = attn[:, :, None] * x
    else:
        # Keep the big slab in its narrow dtype; only attn is cast.
        # (Tiny rounding deviation vs. an f32 multiply; avoids a full-slab
        #  upcast pass / doubled VMEM footprint for bf16 inputs.)
        o_ref[...] = (attn.astype(x.dtype)[:, :, None] * x).astype(o_ref.dtype)


def _ca_pool_kernel(x_ref, w1t_ref, w2t_ref, attn_ref, sum_acc, max_acc,
                    *, hw, hw_chunk):
    """Fallback pass 1: HW-chunked pooling; MLP + sigmoid at the last chunk."""
    hi = pl.program_id(1)

    @pl.when(hi == 0)
    def _():
        sum_acc[...] = jnp.zeros_like(sum_acc)
        max_acc[...] = jnp.full_like(max_acc, -jnp.inf)

    x = x_ref[...]                                           # (bt, C, hw_chunk)
    if hw % hw_chunk != 0:
        # Mask out-of-range lanes of the last chunk (cheap (1,1,chunk) iota).
        lane = (jax.lax.broadcasted_iota(jnp.int32, (1, 1, hw_chunk), 2)
                + hi * hw_chunk)
        valid = lane < hw
        xs = jnp.where(valid, x, jnp.zeros((), x.dtype))
        xm = jnp.where(valid, x, jnp.full((), -jnp.inf, x.dtype))
    else:
        xs = x
        xm = x

    sum_acc[...] += jnp.sum(xs, axis=-1, dtype=jnp.float32)
    max_acc[...] = jnp.maximum(max_acc[...],
                               jnp.max(xm, axis=-1).astype(jnp.float32))

    @pl.when(hi == pl.num_programs(1) - 1)
    def _():
        bt = sum_acc.shape[0]
        avg = sum_acc[...] * (1.0 / hw)
        pooled = jnp.concatenate([avg, max_acc[...]], axis=0)  # (2*bt, C)
        h = jnp.maximum(
            jnp.dot(pooled, w1t_ref[...],
                    preferred_element_type=jnp.float32), 0.0)
        logits = jnp.dot(h, w2t_ref[...], preferred_element_type=jnp.float32)
        attn_ref[...] = jax.nn.sigmoid(logits[:bt] + logits[bt:])[:, :, None]


def _ca_scale_kernel(attn_ref, x_ref, o_ref):
    """Fallback pass 2: broadcast multiply attn over the (chunked) slab."""
    x = x_ref[...]                                           # (bt, C, chunk)
    attn = attn_ref[...]                                     # (bt, C, 1) f32
    if o_ref.dtype == jnp.float32:
        o_ref[...] = attn * x
    else:
        o_ref[...] = (attn.astype(x.dtype) * x).astype(o_ref.dtype)


# --------------------------------------------------------------------------
# Tiling plan
# --------------------------------------------------------------------------
def _vmem_capacity_bytes():
    try:
        cap = int(getattr(pltpu.get_tpu_info(), "vmem_capacity_bytes", 0))
        if cap > 0:
            return cap
    except Exception:
        pass
    # Conservative fallback (v7x-sized); larger chips just use smaller tiles.
    return 64 * 1024 * 1024


def _plan(B, C, HW, itemsize, block_budget_override):
    cap = _vmem_capacity_bytes()
    # ~48 MiB on v7x (64 MiB physical), ~96 MiB on v5e/v6e (128 MiB physical).
    vmem_limit = max(32 << 20, min(cap * 3 // 4, cap - (8 << 20)))

    block_budget = (block_budget_override if block_budget_override is not None
                    else vmem_limit - (4 << 20))
    # in + out blocks double-buffered (~4x) + one block-sized temp + slack.
    per_buffer = max(1, block_budget // 6)
    per_image = C * HW * itemsize

    if per_image <= per_buffer:
        bt = min(B, per_buffer // per_image)
        if B >= 2:
            bt = min(bt, pl.cdiv(B, 2))   # >=2 grid steps -> both v7x TCs busy
        bt = max(bt, 1)
        return "fused", bt, None, vmem_limit

    # Single image slab does not fit: chunk the spatial axis.
    hw_chunk = (per_buffer // (C * itemsize)) // 128 * 128
    hw_chunk = max(128, hw_chunk)
    hw_chunk = min(hw_chunk, pl.cdiv(HW, 128) * 128)
    return "two_pass", 1, hw_chunk, vmem_limit


# --------------------------------------------------------------------------
# Wrapper
# --------------------------------------------------------------------------
@functools.partial(jax.jit, static_argnames=("block_budget_override",))
def channel_attention(x, w1, w2, *, block_budget_override=None):
    """x: (B, C, H, W); w1: (C//ratio, C); w2: (C, C//ratio)."""
    B, C, H, W = x.shape
    HW = H * W
    Cr = w1.shape[0]
    itemsize = jnp.dtype(x.dtype).itemsize

    x3 = x.reshape(B, C, HW)
    w1t = w1.T.astype(jnp.float32)        # (C, Cr)
    w2t = w2.T.astype(jnp.float32)        # (Cr, C)

    mode, bt, hw_chunk, vmem_limit = _plan(B, C, HW, itemsize,
                                           block_budget_override)

    if mode == "fused":
        grid = (pl.cdiv(B, bt),)          # ragged last block is fine: rows
                                          # are independent, OOB writes dropped
        out = pl.pallas_call(
            functools.partial(_ca_fused_kernel, hw=HW),
            out_shape=jax.ShapeDtypeStruct((B, C, HW), x.dtype),
            grid_spec=pltpu.PrefetchScalarGridSpec(
                num_scalar_prefetch=0,
                grid=grid,
                in_specs=[
                    pl.BlockSpec((bt, C, HW), lambda b: (b, 0, 0)),
                    pl.BlockSpec((C, Cr), lambda b: (0, 0)),
                    pl.BlockSpec((Cr, C), lambda b: (0, 0)),
                ],
                out_specs=pl.BlockSpec((bt, C, HW), lambda b: (b, 0, 0)),
            ),
            compiler_params=pltpu.CompilerParams(
                dimension_semantics=("parallel",),
                vmem_limit_bytes=int(vmem_limit)),
            cost_estimate=pl.CostEstimate(
                flops=B * C * (3 * HW + 8 * Cr),
                transcendentals=B * C,
                bytes_accessed=2 * B * C * HW * itemsize + 2 * C * Cr * 4),
        )(x3, w1t, w2t)
        return out.reshape(B, C, H, W)

    # ---- two-pass fallback: HW-chunked pool + MLP, then scale -------------
    n_b = pl.cdiv(B, bt)
    n_h = pl.cdiv(HW, hw_chunk)

    attn = pl.pallas_call(
        functools.partial(_ca_pool_kernel, hw=HW, hw_chunk=hw_chunk),
        out_shape=jax.ShapeDtypeStruct((B, C, 1), jnp.float32),
        grid_spec=pltpu.PrefetchScalarGridSpec(
            num_scalar_prefetch=0,
            grid=(n_b, n_h),
            in_specs=[
                pl.BlockSpec((bt, C, hw_chunk), lambda b, h: (b, 0, h)),
                pl.BlockSpec((C, Cr), lambda b, h: (0, 0)),
                pl.BlockSpec((Cr, C), lambda b, h: (0, 0)),
            ],
            out_specs=pl.BlockSpec((bt, C, 1), lambda b, h: (b, 0, 0)),
            scratch_shapes=[pltpu.VMEM((bt, C), jnp.float32),
                            pltpu.VMEM((bt, C), jnp.float32)],
        ),
        compiler_params=pltpu.CompilerParams(
            dimension_semantics=("parallel", "arbitrary"),
            vmem_limit_bytes=int(vmem_limit)),
    )(x3, w1t, w2t)

    out = pl.pallas_call(
        _ca_scale_kernel,
        out_shape=jax.ShapeDtypeStruct((B, C, HW), x.dtype),
        grid_spec=pltpu.PrefetchScalarGridSpec(
            num_scalar_prefetch=0,
            grid=(n_b, n_h),
            in_specs=[
                pl.BlockSpec((bt, C, 1), lambda b, h: (b, 0, 0)),
                pl.BlockSpec((bt, C, hw_chunk), lambda b, h: (b, 0, h)),
            ],
            out_specs=pl.BlockSpec((bt, C, hw_chunk), lambda b, h: (b, 0, h)),
        ),
        compiler_params=pltpu.CompilerParams(
            dimension_semantics=("parallel", "parallel"),
            vmem_limit_bytes=int(vmem_limit)),
    )(attn, x3)
    return out.reshape(B, C, H, W)


# --------------------------------------------------------------------------
# Pure-JAX reference (mirrors the PyTorch forward)
# --------------------------------------------------------------------------
def channel_attention_ref(x, w1, w2):
    xf = x.astype(jnp.float32)
    avg = jnp.mean(xf, axis=(2, 3))                               # (B, C)
    mx = jnp.max(xf, axis=(2, 3))                                 # (B, C)

    def mlp(v):
        h = jnp.maximum(v @ w1.T.astype(jnp.float32), 0.0)        # (B, Cr)
        return h @ w2.T.astype(jnp.float32)                       # (B, C)

    attn = jax.nn.sigmoid(mlp(avg) + mlp(mx))[:, :, None, None]
    return (attn * xf).astype(x.dtype)


if __name__ == "__main__":
    key = jax.random.PRNGKey(0)
    kx, k1, k2, kx2, k3, k4 = jax.random.split(key, 6)

    # --- case 1: fused single-pass path (non-128 HW, ragged batch grid) ----
    B, C, H, W, ratio = 3, 16, 10, 10, 8
    Cr = C // ratio
    x = jax.random.normal(kx, (B, C, H, W), dtype=jnp.float32)
    w1 = jax.random.normal(k1, (Cr, C), dtype=jnp.float32) * (C ** -0.5)
    w2 = jax.random.normal(k2, (C, Cr), dtype=jnp.float32) * (Cr ** -0.5)

    out = jax.block_until_ready(channel_attention(x, w1, w2))
    ref = channel_attention_ref(x, w1, w2)
    assert out.shape == (B, C, H, W)
    assert jnp.allclose(out, ref, atol=1e-5, rtol=1e-5), "fused path mismatch"

    # --- case 2: two-pass HW-chunked fallback (forced via tiny budget) -----
    B2, C2, H2, W2, ratio2 = 2, 8, 30, 30, 8
    Cr2 = C2 // ratio2
    x2 = jax.random.normal(kx2, (B2, C2, H2, W2), dtype=jnp.float32)
    w1b = jax.random.normal(k3, (Cr2, C2), dtype=jnp.float32) * (C2 ** -0.5)
    w2b = jax.random.normal(k4, (C2, Cr2), dtype=jnp.float32) * (Cr2 ** -0.5)

    out2 = jax.block_until_ready(
        channel_attention(x2, w1b, w2b, block_budget_override=96 * 1024))
    ref2 = channel_attention_ref(x2, w1b, w2b)
    assert out2.shape == (B2, C2, H2, W2)
    assert jnp.allclose(out2, ref2, atol=1e-5, rtol=1e-5), "fallback mismatch"

    print("KERNEL_OK")
</pallas_src>

<mosaic_0001>
module attributes {stable_mosaic.version = 11 : i64} {
  func.func @_ca_fused_kernel(%arg0: i32, %arg1: memref<2x16x100xf32, #tpu.memory_space<vmem>>, %arg2: memref<16x2xf32, #tpu.memory_space<vmem>>, %arg3: memref<2x16xf32, #tpu.memory_space<vmem>>, %arg4: memref<2x16x100xf32, #tpu.memory_space<vmem>>) attributes {dimension_semantics = [#tpu.dimension_semantics<parallel>], iteration_bounds = array<i64: 2>, scalar_prefetch = 0 : i64, scratch_operands = 0 : i64, tpu.core_type = #tpu.core_type<tc>, window_params = [{transform_indices = @transform_0, window_bounds = array<i64: 2, 16, 100>}, {pipeline_mode = #tpu.pipeline_mode<synchronous>, transform_indices = @transform_1, window_bounds = array<i64: 16, 2>}, {pipeline_mode = #tpu.pipeline_mode<synchronous>, transform_indices = @transform_2, window_bounds = array<i64: 2, 16>}, {transform_indices = @transform_3, window_bounds = array<i64: 2, 16, 100>}]} {
    %c0 = arith.constant 0 : index
    %c0_0 = arith.constant 0 : index
    %c0_1 = arith.constant 0 : index
    %0 = vector.load %arg1[%c0, %c0_0, %c0_1] : memref<2x16x100xf32, #tpu.memory_space<vmem>>, vector<2x16x100xf32>
    %cst = arith.constant dense<0.000000e+00> : vector<2x16xf32>
    %1 = vector.multi_reduction <add>, %0, %cst [2] : vector<2x16x100xf32> to vector<2x16xf32>
    %cst_2 = arith.constant 0.00999999977 : f32
    %2 = vector.broadcast %cst_2 : f32 to vector<2x16xf32>
    %3 = arith.mulf %1, %2 : vector<2x16xf32>
    %cst_3 = arith.constant dense<0xFF800000> : vector<2x16xf32>
    %4 = vector.multi_reduction <maximumf>, %0, %cst_3 [2] : vector<2x16x100xf32> to vector<2x16xf32>
    %5 = tpu.concatenate %3, %4 in 0 : vector<2x16xf32>, vector<2x16xf32> -> vector<4x16xf32>
    %c0_4 = arith.constant 0 : index
    %c0_5 = arith.constant 0 : index
    %6 = vector.load %arg2[%c0_4, %c0_5] : memref<16x2xf32, #tpu.memory_space<vmem>>, vector<16x2xf32>
    %cst_6 = arith.constant dense<0.000000e+00> : vector<4x2xf32>
    %7 = tpu.matmul %5, %6, %cst_6 {dimension_numbers = #tpu.dot_dimension_numbers<[1], [0], [0], [1], [0, 0, 1, 1], [], []>} : vector<4x16xf32>, vector<16x2xf32>, vector<4x2xf32> -> vector<4x2xf32>
    %cst_7 = arith.constant 0.000000e+00 : f32
    %8 = vector.broadcast %cst_7 : f32 to vector<4x2xf32>
    %9 = arith.maximumf %7, %8 : vector<4x2xf32>
    %c0_8 = arith.constant 0 : index
    %c0_9 = arith.constant 0 : index
    %10 = vector.load %arg3[%c0_8, %c0_9] : memref<2x16xf32, #tpu.memory_space<vmem>>, vector<2x16xf32>
    %cst_10 = arith.constant dense<0.000000e+00> : vector<4x16xf32>
    %11 = tpu.matmul %9, %10, %cst_10 {dimension_numbers = #tpu.dot_dimension_numbers<[1], [0], [0], [1], [0, 0, 1, 1], [], []>} : vector<4x2xf32>, vector<2x16xf32>, vector<4x16xf32> -> vector<4x16xf32>
    %12 = vector.extract_strided_slice %11 {offsets = [0, 0], sizes = [2, 16], strides = [1, 1]} : vector<4x16xf32> to vector<2x16xf32>
    %13 = vector.extract_strided_slice %11 {offsets = [2, 0], sizes = [2, 16], strides = [1, 1]} : vector<4x16xf32> to vector<2x16xf32>
    %14 = arith.addf %12, %13 : vector<2x16xf32>
    %15 = arith.negf %14 : vector<2x16xf32>
    %16 = math.exp %15 : vector<2x16xf32>
    %cst_11 = arith.constant 1.000000e+00 : f32
    %17 = vector.broadcast %cst_11 : f32 to vector<2x16xf32>
    %18 = arith.addf %17, %16 : vector<2x16xf32>
    %19 = arith.divf %17, %18 : vector<2x16xf32>
    %20 = vector.shape_cast %19 : vector<2x16xf32> to vector<2x16x1xf32>
    %21 = vector.broadcast %20 : vector<2x16x1xf32> to vector<2x16x100xf32>
    %22 = arith.mulf %21, %0 : vector<2x16x100xf32>
    %c0_12 = arith.constant 0 : index
    %c0_13 = arith.constant 0 : index
    %c0_14 = arith.constant 0 : index
    %23 = vector.load %arg4[%c0_12, %c0_13, %c0_14] : memref<2x16x100xf32, #tpu.memory_space<vmem>>, vector<2x16x100xf32>
    tpu.vector_store %arg4[%c0_12, %c0_13, %c0_14], %22 {strides = array<i32>} : memref<2x16x100xf32, #tpu.memory_space<vmem>>, vector<2x16x100xf32>,
    return
  }
  func.func @transform_0(%arg0: i32) -> (i32, i32, i32) {
    %c0_i32 = arith.constant 0 : i32
    %c0_i32_0 = arith.constant 0 : i32
    %c0_i32_1 = arith.constant 0 : i32
    return %arg0, %c0_i32, %c0_i32_0 : i32, i32, i32
  }
  func.func @transform_1(%arg0: i32) -> (i32, i32) {
    %c0_i32 = arith.constant 0 : i32
    %c0_i32_0 = arith.constant 0 : i32
    %c0_i32_1 = arith.constant 0 : i32
    return %c0_i32, %c0_i32_0 : i32, i32
  }
  func.func @transform_2(%arg0: i32) -> (i32, i32) {
    %c0_i32 = arith.constant 0 : i32
    %c0_i32_0 = arith.constant 0 : i32
    %c0_i32_1 = arith.constant 0 : i32
    return %c0_i32, %c0_i32_0 : i32, i32
  }
  func.func @transform_3(%arg0: i32) -> (i32, i32, i32) {
    %c0_i32 = arith.constant 0 : i32
    %c0_i32_0 = arith.constant 0 : i32
    %c0_i32_1 = arith.constant 0 : i32
    return %arg0, %c0_i32, %c0_i32_0 : i32, i32, i32
  }
}

</mosaic_0001>

<llo_original>
// kernel: channel_attention.1
$region0: #{channel_attention.1}
  #allocation0 [shape = 'u32[]', space=smem, size = 0x4, offset = 0x4, fixed_abs, tag = 'smem constant byte address 0x4 - core index']
  #allocation1 [shape = 'u32[144,128]{1,0:T(1,128)}', space=vmem, size = 0x12000, scoped, tag = 'internal scratch']
  %s0 = inlined_call_operand.vmem [shape: f32[3,16,100], index: 0, kind: input, shape index: {}]
  %s1 = inlined_call_operand.vmem [shape: f32[16,2], index: 1, kind: input, shape index: {}]
  %s2 = inlined_call_operand.vmem [shape: f32[2,16], index: 2, kind: input, shape index: {}]
  %s3 = inlined_call_operand.vmem [shape: f32[3,16,100], index: 3, kind: output, shape index: {}]
  %s4 = sld [smem:[#allocation0]]
  $region93: #{channel_attention.1} parent=0
    _
  %s6 = ssub.s32 1, %s4
  %s7 = scalar_select 0, %s6, %s4
  $region1: #{channel_attention.1} parent=0
    #allocation2 [shape = 'u8[32768]{0}', space=vmem, size = 0x8000, scoped, tag = 'output window, operand 0']
    loop: start=0, step=1, limit=4
    $region2: #{channel_attention.1} parent=1 // loop_pre_header
      _
    $region3: #{channel_attention.1} parent=1 // loop_header
      %s9 = sphi 0, %s13
      %p10 = scmp.ge.s32.totalorder %s9, 4
      %s19 = sphi 0, %s21
      %s22 = sphi 0, %s19
      %s23 = sphi 0, %s22
      %s39 = sphi 0, %s23
      %s43 = sphi 0, %s43
      %s45 = sphi 0, %s43
      %s46 = sphi 0, %s45
      %s60 = sphi 0, %s46
      %s64 = sphi 0, %s64
      %s66 = sphi 0, %s64
      %s67 = sphi 0, %s66
      %s81 = sphi 0, %s67
      %s87 = sphi 0, %s89
      %s90 = sphi 0, %s87
      %s91 = sphi 0, %s90
      %s107 = sphi 0, %s91
    $region4: #{channel_attention.1} parent=1 // loop_header_branch
      %12 = sbr.rel (%p10) target = $region8
    $region5: #{channel_attention.1} parent=1 // loop_body
      %s14 = ssub.s32 %s9, 1
      %s15 = ssub.s32 %s9, 2
      %s16 = sadd.s32 %s9, 1
      %s17 = ssub.s32 %s9, %s16
      %p18 = scmp.eq.s32.totalorder %s17, 0
      %s20 = sadd.s32 %s19, 1
      %s21 = scalar_select %p18, %s19, %s20
      %p24 = pneg %p18
      %p25 = scmp.eq.s32.totalorder %s9, 1
      %p26 = por %p24, %p25
      %p27 = scmp.ne.s32.totalorder %s19, %s22
      %p28 = scmp.eq.s32.totalorder %s9, 0
      %p29 = por %p27, %p28
      %p30 = scmp.ne.s32.totalorder %s19, %s22
      %p31 = scmp.eq.s32.totalorder %s14, 1
      %p32 = por %p30, %p31
      %p33 = scmp.ne.s32.totalorder %s22, %s23
      %p34 = scmp.eq.s32.totalorder %s14, 0
      %p35 = por %p33, %p34
      %p36 = scmp.ne.s32.totalorder %s22, %s23
      %p37 = scmp.eq.s32.totalorder %s15, 1
      %p38 = por %p36, %p37
      %p40 = scmp.ne.s32.totalorder %s23, %s39
      %p41 = scmp.eq.s32.totalorder %s15, 0
      %p42 = por %p40, %p41
      %s44 = sadd.s32 %s43, 1
      %p47 = scmp.eq.s32.totalorder %s9, 1
      %p48 = scmp.ne.s32.totalorder %s43, %s45
      %p49 = scmp.eq.s32.totalorder %s9, 0
      %p50 = por %p48, %p49
      %p51 = scmp.ne.s32.totalorder %s43, %s45
      %p52 = scmp.eq.s32.totalorder %s14, 1
      %p53 = por %p51, %p52
      %p54 = scmp.ne.s32.totalorder %s45, %s46
      %p55 = scmp.eq.s32.totalorder %s14, 0
      %p56 = por %p54, %p55
      %p57 = scmp.ne.s32.totalorder %s45, %s46
      %p58 = scmp.eq.s32.totalorder %s15, 1
      %p59 = por %p57, %p58
      %p61 = scmp.ne.s32.totalorder %s46, %s60
      %p62 = scmp.eq.s32.totalorder %s15, 0
      %p63 = por %p61, %p62
      %s65 = sadd.s32 %s64, 1
      %p68 = scmp.eq.s32.totalorder %s9, 1
      %p69 = scmp.ne.s32.totalorder %s64, %s66
      %p70 = scmp.eq.s32.totalorder %s9, 0
      %p71 = por %p69, %p70
      %p72 = scmp.ne.s32.totalorder %s64, %s66
      %p73 = scmp.eq.s32.totalorder %s14, 1
      %p74 = por %p72, %p73
      %p75 = scmp.ne.s32.totalorder %s66, %s67
      %p76 = scmp.eq.s32.totalorder %s14, 0
      %p77 = por %p75, %p76
      %p78 = scmp.ne.s32.totalorder %s66, %s67
      %p79 = scmp.eq.s32.totalorder %s15, 1
      %p80 = por %p78, %p79
      %p82 = scmp.ne.s32.totalorder %s67, %s81
      %p83 = scmp.eq.s32.totalorder %s15, 0
      %p84 = por %p82, %p83
      %s85 = ssub.s32 %s9, %s16
      %p86 = scmp.eq.s32.totalorder %s85, 0
      %s88 = sadd.s32 %s87, 1
      %s89 = scalar_select %p86, %s87, %s88
      %p92 = pneg %p86
      %p93 = scmp.eq.s32.totalorder %s9, 1
      %p94 = por %p92, %p93
      %p95 = scmp.ne.s32.totalorder %s87, %s90
      %p96 = scmp.eq.s32.totalorder %s9, 0
      %p97 = por %p95, %p96
      %p98 = scmp.ne.s32.totalorder %s87, %s90
      %p99 = scmp.eq.s32.totalorder %s14, 1
      %p100 = por %p98, %p99
      %p101 = scmp.ne.s32.totalorder %s90, %s91
      %p102 = scmp.eq.s32.totalorder %s14, 0
      %p103 = por %p101, %p102
      %p104 = scmp.ne.s32.totalorder %s90, %s91
      %p105 = scmp.eq.s32.totalorder %s15, 1
      %p106 = por %p104, %p105
      %p108 = scmp.ne.s32.totalorder %s91, %s107
      %p109 = scmp.eq.s32.totalorder %s15, 0
      %p110 = por %p108, %p109
      %p111 = scmp.le.s32.totalorder 1, %s9
      %p112 = scmp.lt.s32.totalorder %s9, 3
      %p113 = pnand %p111, %p112
      %p114 = pneg %p113
      // Predicated region
      $region9: #{channel_attention.1} parent=5 // pred_check
        _
      $region10: #{channel_attention.1} parent=5 // pred_check_branch
        %116 = sbr.rel (%p113) target = $region12
      $region11: #{channel_attention.1} parent=5 // pred_region
        %s117 = ssub.s32 %s9, 1
        // Predicated region
        $region13: #{channel_attention.1} parent=11 // pred_check
          %p118 = pneg %p56
        $region14: #{channel_attention.1} parent=11 // pred_check_branch
          %120 = sbr.rel (%p118) target = $region16
        $region15: #{channel_attention.1} parent=11 // pred_region
          _
        $region16: #{channel_attention.1} parent=11 // pred_fallthru
          _
        // Predicated region
        $region17: #{channel_attention.1} parent=11 // pred_check
          %p121 = pneg %p77
        $region18: #{channel_attention.1} parent=11 // pred_check_branch
          %123 = sbr.rel (%p121) target = $region20
        $region19: #{channel_attention.1} parent=11 // pred_region
          _
        $region20: #{channel_attention.1} parent=11 // pred_fallthru
          _
      $region12: #{channel_attention.1} parent=5 // pred_fallthru
        _
      %p124 = scmp.lt.s32.totalorder %s9, 2
      // Predicated region
      $region21: #{channel_attention.1} parent=5 // pred_check
        %p125 = pneg %p124
      $region22: #{channel_attention.1} parent=5 // pred_check_branch
        %127 = sbr.rel (%p125) target = $region24
      $region23: #{channel_attention.1} parent=5 // pred_region
        // Predicated region
        $region25: #{channel_attention.1} parent=23 // pred_check
          %p128 = pneg %p29
        $region26: #{channel_attention.1} parent=23 // pred_check_branch
          %130 = sbr.rel (%p128) target = $region28
        $region27: #{channel_attention.1} parent=23 // pred_region
          %s131 = smul.u32 2, %s9
          %s132 = ssub.s32 3, %s131
          %p133 = scmp.lt.s32.totalorder %s132, 2
          %s134 = scalar_select %p133, %s132, 2
          %s135 = smul.u32 128, %s134
          %s136 = smul.u32 %s135, 2
          %p137 = scmp.lt.s32.totalorder %s131, 2
          %s138 = scalar_select %p137, %s131, 2
          %s139 = smul.addr %s138, 2
          %s140 = smul.addr %s139, 8
          %s141 = scalar_lea.vmem %s0, %s140
          %s142 = smul.u32 2, %s9
          %s143 = ssub.s32 3, %s142
          %p144 = scmp.lt.s32.totalorder %s143, 2
          %s145 = scalar_select %p144, %s143, 2
          %s146 = smul.u32 128, %s145
          %s147 = smul.u32 %s146, 2
        $region28: #{channel_attention.1} parent=23 // pred_fallthru
          _
      $region24: #{channel_attention.1} parent=5 // pred_fallthru
        _
      %p148 = scmp.le.s32.totalorder 1, %s9
      %p149 = scmp.lt.s32.totalorder %s9, 3
      %p150 = pnand %p148, %p149
      %p151 = pneg %p150
      // Predicated region
      $region29: #{channel_attention.1} parent=5 // pred_check
        _
      $region30: #{channel_attention.1} parent=5 // pred_check_branch
        %153 = sbr.rel (%p150) target = $region32
      $region31: #{channel_attention.1} parent=5 // pred_region
        %s154 = ssub.s32 %s9, 1
        %s155 = smul.u32 2, %s14
        %s156 = ssub.s32 3, %s155
        %p157 = scmp.lt.s32.totalorder %s156, 2
        %s158 = scalar_select %p157, %s156, 2
        %s159 = smul.u32 128, %s158
        %s160 = smul.u32 %s159, 2
        %p161 = scmp.lt.s32.totalorder %s155, 2
        %s162 = scalar_select %p161, %s155, 2
        %s163 = smul.addr %s162, 2
        %s164 = smul.addr %s163, 8
        %s165 = scalar_lea.vmem %s0, %s164
        %p166 = pneg %p35
        %p167 = pneg %p32
        %p168 = pneg %p56
        %p169 = pneg %p53
        %p170 = pneg %p77
        %p171 = pneg %p74
        %p172 = pneg %p103
        %p173 = pneg %p100
        %s174 = sand.u32 %s90, 1
        %s175 = sand.u32 %s90, 1
        %s176 = smul.addr %s175, 32
        %s177 = scalar_lea.vmem [#allocation2], %s176
        %s178 = smul.u32 2, %s14
        %s179 = ssub.s32 3, %s178
        %p180 = scmp.lt.s32.totalorder %s179, 2
        %s181 = scalar_select %p180, %s179, 2
        %s182 = smul.u32 128, %s181
        %s183 = smul.u32 %s182, 2
        %p184 = scmp.lt.s32.totalorder %s178, 2
        %s185 = scalar_select %p184, %s178, 2
        %s186 = smul.addr %s185, 2
        %s187 = smul.addr %s186, 8
        %s188 = scalar_lea.vmem %s0, %s187
        %s189 = smul.u32 2, %s14
        %s190 = ssub.s32 3, %s189
        %p191 = scmp.lt.s32.totalorder %s190, 2
        %s192 = scalar_select %p191, %s190, 2
        %s193 = smul.u32 128, %s192
        %s194 = smul.u32 %s193, 2
        %s195 = smul.u32 2, %s14
        %s196 = ssub.s32 3, %s195
        %p197 = scmp.lt.s32.totalorder %s196, 2
        %s198 = scalar_select %p197, %s196, 2
        %s199 = smul.u32 128, %s198
        %s200 = smul.u32 %s199, 2
        %v201 = vld [vmem:[%s188] sm:$0xff]
        %v202 = vld [vmem:[%s188 + $0x8] sm:$0xff]
        %v203 = vld [vmem:[%s188 + $0x10] sm:$0xff]
        %v204 = vld [vmem:[%s188 + $0x18] sm:$0xff]
        %vm205 = vcmask 818176
        %v206 = vsel %vm205, %v201, 0.0
        %207 = vadd.xlane.f32.xlu0 %v206
        %v208 = vpop.xlane.xlu0 %207
        %v209 = vsel %vm205, %v202, 0.0
        %210 = vadd.xlane.f32.xlu0 %v209
        %v211 = vpop.xlane.xlu0 %210
        %v212 = vsel %vm205, %v203, 0.0
        %213 = vadd.xlane.f32.xlu0 %v212
        %v214 = vpop.xlane.xlu0 %213
        %v215 = vsel %vm205, %v204, 0.0
        %216 = vadd.xlane.f32.xlu0 %v215
        %v217 = vpop.xlane.xlu0 %216
        %v218 = vmul.f32 %v208, 0.01
        %v219 = vmul.f32 %v211, 0.01
        %v220 = vmul.f32 %v214, 0.01
        %v221 = vmul.f32 %v217, 0.01
        %v222 = vsel %vm205, %v201, -inf
        %223 = vmax.xlane.f32.xlu0 %v222
        %v224 = vpop.xlane.xlu0 %223
        %v225 = vsel %vm205, %v202, -inf
        %226 = vmax.xlane.f32.xlu0 %v225
        %v227 = vpop.xlane.xlu0 %226
        %v228 = vsel %vm205, %v203, -inf
        %229 = vmax.xlane.f32.xlu0 %v228
        %v230 = vpop.xlane.xlu0 %229
        %v231 = vsel %vm205, %v204, -inf
        %232 = vmax.xlane.f32.xlu0 %v231
        %v233 = vpop.xlane.xlu0 %232
        %v238 = vlaneseq
        %v239 = vand.u32 %v238, 127
        %v240 = vlaneseq
        %v241 = vshrl.u32 %v240, 7
        %v242 = vsub.s32 %v239, %v241
        %v243 = vrot.slane %v218, %v242
        %v244 = vadd.s32 %v239, 4294967288
        %v245 = vlaneseq
        %v246 = vshrl.u32 %v245, 7
        %v247 = vsub.s32 %v244, %v246
        %v248 = vrot.slane %v219, %v247
        %vm249 = vcmask 130112
        %v250 = vsel %vm249, %v248, %v243
        %v251 = vlaneseq
        %v252 = vshrl.u32 %v251, 7
        %v253 = vsub.s32 %v239, %v252
        %v254 = vrot.slane %v220, %v253
        %v255 = vlaneseq
        %v256 = vshrl.u32 %v255, 7
        %v257 = vsub.s32 %v244, %v256
        %v258 = vrot.slane %v221, %v257
        %v259 = vsel %vm249, %v258, %v254
        %vm260 = vcmask 1041409
        %v261 = vsel %vm260, %v259, %v250
        %v267 = vlaneseq
        %v268 = vshrl.u32 %v267, 7
        %v269 = vsub.s32 %v239, %v268
        %v270 = vrot.slane %v224, %v269
        %v271 = vlaneseq
        %v272 = vshrl.u32 %v271, 7
        %v273 = vsub.s32 %v244, %v272
        %v274 = vrot.slane %v227, %v273
        %v275 = vsel %vm249, %v274, %v270
        %v276 = vlaneseq
        %v277 = vshrl.u32 %v276, 7
        %v278 = vsub.s32 %v239, %v277
        %v279 = vrot.slane %v230, %v278
        %v280 = vlaneseq
        %v281 = vshrl.u32 %v280, 7
        %v282 = vsub.s32 %v244, %v281
        %v283 = vrot.slane %v233, %v282
        %v284 = vsel %vm249, %v283, %v279
        %vm285 = vcmask 1043459
        %v286 = vsel %vm285, %v284, %v275
        %vm288 = vcmask 1041408
        %v289 = vsel %vm288, %v261, %v286
        %v290 = vld [vmem:[%s1] sm:$0xff]
        %v291 = vld [vmem:[%s1 + $0x8] sm:$0xff]
        %vm292 = vcmask 130048
        %v294 = vsel %vm292, %v289, 0
        %296 = vmatprep.subr.mxu0 0.0
        %297 = vmatpush1.msra.mxu0 0.0
        %298 = vmatprep.subr.mxu0 0.0
        %299 = vmatpush1.msra.mxu0 0.0
        %300 = vmatprep.subr.mxu0 0.0
        %301 = vmatpush1.msra.mxu0 0.0
        %302 = vmatprep.subr.mxu0 0.0
        %303 = vmatpush1.msra.mxu0 0.0
        %304 = vmatprep.subr.mxu0 0.0
        %305 = vmatpush1.msra.mxu0 0.0
        %306 = vmatprep.subr.mxu0 0.0
        %307 = vmatpush1.msra.mxu0 0.0
        %308 = vmatprep.subr.mxu0 0.0
        %309 = vmatpush1.msra.mxu0 0.0
        %310 = vmatprep.subr.mxu0 0.0
        %311 = vmatpush1.msra.mxu0 0.0
        %312 = vmatprep.subr.mxu0 0.0
        %313 = vmatpush1.msra.mxu0 0.0
        %314 = vmatprep.subr.mxu0 0.0
        %315 = vmatpush1.msra.mxu0 0.0
        %316 = vmatprep.subr.mxu0 0.0
        %317 = vmatpush1.msra.mxu0 0.0
        %318 = vmatprep.subr.mxu0 0.0
        %319 = vmatpush1.msra.mxu0 0.0
        %320 = vmatprep.subr.mxu0 0.0
        %321 = vmatpush1.msra.mxu0 0.0
        %322 = vmatprep.subr.mxu0 0.0
        %323 = vmatpush1.msra.mxu0 0.0
        %324 = vmatprep.subr.mxu0 0.0
        %325 = vmatpush1.msra.mxu0 %v291
        %326 = vmatprep.subr.mxu0 0.0
        %327 = vmatpush1.msra.mxu0 %v290
        %328 = vmatprep.subr.mxu0 0.0
        %329 = vmatpush2.msra.mxu0 0.0
        %330 = vmatprep.subr.mxu0 0.0
        %331 = vmatpush2.msra.mxu0 0.0
        %332 = vmatprep.subr.mxu0 0.0
        %333 = vmatpush2.msra.mxu0 0.0
        %334 = vmatprep.subr.mxu0 0.0
        %335 = vmatpush2.msra.mxu0 0.0
        %336 = vmatprep.subr.mxu0 0.0
        %337 = vmatpush2.msra.mxu0 0.0
        %338 = vmatprep.subr.mxu0 0.0
        %339 = vmatpush2.msra.mxu0 0.0
        %340 = vmatprep.subr.mxu0 0.0
        %341 = vmatpush2.msra.mxu0 0.0
        %342 = vmatprep.subr.mxu0 0.0
        %343 = vmatpush2.msra.mxu0 0.0
        %344 = vmatprep.subr.mxu0 0.0
        %345 = vmatpush2.msra.mxu0 0.0
        %346 = vmatprep.subr.mxu0 0.0
        %347 = vmatpush2.msra.mxu0 0.0
        %348 = vmatprep.subr.mxu0 0.0
        %349 = vmatpush2.msra.mxu0 0.0
        %350 = vmatprep.subr.mxu0 0.0
        %351 = vmatpush2.msra.mxu0 0.0
        %352 = vmatprep.subr.mxu0 0.0
        %353 = vmatpush2.msra.mxu0 0.0
        %354 = vmatprep.subr.mxu0 0.0
        %355 = vmatpush2.msra.mxu0 0.0
        %356 = vmatprep.subr.mxu0 0.0
        %357 = vmatpush2.msra.mxu0 0.0
        %358 = vmatprep.subr.mxu0 0.0
        %359 = vmatpush2.msra.mxu0 0.0
        %360 = vmatprep.mubr.f32.mxu0 0.0
        %361 = vmatmul.mubr.f32.gmra.mxu0 %v294
        %v362 = vpop.f32.mrf.mxu0
        %v363 = vadd.f32 0.0, %v362
        %v364 = vpop.f32.mrf.mxu0
        %365 = vdwg.mxu0
        %v366 = vmax.f32 %v363, 0.0
        %v367 = vld [vmem:[%s2] sm:$0x3]
        %vm368 = vcmask 15360
        %v370 = vsel %vm368, %v366, 0
        %v373 = vsel %vm288, %v367, 0
        %375 = vmatprep.subr.mxu0 0.0
        %376 = vmatpush1.msra.mxu0 0.0
        %377 = vmatprep.subr.mxu0 0.0
        %378 = vmatpush1.msra.mxu0 0.0
        %379 = vmatprep.subr.mxu0 0.0
        %380 = vmatpush1.msra.mxu0 0.0
        %381 = vmatprep.subr.mxu0 0.0
        %382 = vmatpush1.msra.mxu0 0.0
        %383 = vmatprep.subr.mxu0 0.0
        %384 = vmatpush1.msra.mxu0 0.0
        %385 = vmatprep.subr.mxu0 0.0
        %386 = vmatpush1.msra.mxu0 0.0
        %387 = vmatprep.subr.mxu0 0.0
        %388 = vmatpush1.msra.mxu0 0.0
        %389 = vmatprep.subr.mxu0 0.0
        %390 = vmatpush1.msra.mxu0 0.0
        %391 = vmatprep.subr.mxu0 0.0
        %392 = vmatpush1.msra.mxu0 0.0
        %393 = vmatprep.subr.mxu0 0.0
        %394 = vmatpush1.msra.mxu0 0.0
        %395 = vmatprep.subr.mxu0 0.0
        %396 = vmatpush1.msra.mxu0 0.0
        %397 = vmatprep.subr.mxu0 0.0
        %398 = vmatpush1.msra.mxu0 0.0
        %399 = vmatprep.subr.mxu0 0.0
        %400 = vmatpush1.msra.mxu0 0.0
        %401 = vmatprep.subr.mxu0 0.0
        %402 = vmatpush1.msra.mxu0 0.0
        %403 = vmatprep.subr.mxu0 0.0
        %404 = vmatpush1.msra.mxu0 0.0
        %405 = vmatprep.subr.mxu0 0.0
        %406 = vmatpush1.msra.mxu0 %v373
        %407 = vmatprep.subr.mxu0 0.0
        %408 = vmatpush2.msra.mxu0 0.0
        %409 = vmatprep.subr.mxu0 0.0
        %410 = vmatpush2.msra.mxu0 0.0
        %411 = vmatprep.subr.mxu0 0.0
        %412 = vmatpush2.msra.mxu0 0.0
        %413 = vmatprep.subr.mxu0 0.0
        %414 = vmatpush2.msra.mxu0 0.0
        %415 = vmatprep.subr.mxu0 0.0
        %416 = vmatpush2.msra.mxu0 0.0
        %417 = vmatprep.subr.mxu0 0.0
        %418 = vmatpush2.msra.mxu0 0.0
        %419 = vmatprep.subr.mxu0 0.0
        %420 = vmatpush2.msra.mxu0 0.0
        %421 = vmatprep.subr.mxu0 0.0
        %422 = vmatpush2.msra.mxu0 0.0
        %423 = vmatprep.subr.mxu0 0.0
        %424 = vmatpush2.msra.mxu0 0.0
        %425 = vmatprep.subr.mxu0 0.0
        %426 = vmatpush2.msra.mxu0 0.0
        %427 = vmatprep.subr.mxu0 0.0
        %428 = vmatpush2.msra.mxu0 0.0
        %429 = vmatprep.subr.mxu0 0.0
        %430 = vmatpush2.msra.mxu0 0.0
        %431 = vmatprep.subr.mxu0 0.0
        %432 = vmatpush2.msra.mxu0 0.0
        %433 = vmatprep.subr.mxu0 0.0
        %434 = vmatpush2.msra.mxu0 0.0
        %435 = vmatprep.subr.mxu0 0.0
        %436 = vmatpush2.msra.mxu0 0.0
        %437 = vmatprep.subr.mxu0 0.0
        %438 = vmatpush2.msra.mxu0 0.0
        %439 = vmatprep.mubr.f32.mxu0 0.0
        %440 = vmatmul.mubr.f32.gmra.mxu0 %v370
        %v441 = vpop.f32.mrf.mxu0
        %v442 = vadd.f32 0.0, %v441
        %v443 = vpop.f32.mrf.mxu0
        %444 = vdwg.mxu0
        %v446 = vrot.slane %v442, 2
        %v448 = vadd.f32 %v442, %v446
        %v449 = vxor.u32 %v448, 2147483648
        %v450 = vmul.f32 %v449, 1.442695
        %v451 = vpow.pop %v450
        %v452 = vadd.f32 %v451, 1.0
        %v453 = vrcp.pop %v452
        %v454 = vmul.f32 1.0, %v453
        %v455 = vlaneseq
        %v456 = vshrl.u32 %v455, 7
        %v457 = vsub.s32 0, %v456
        %v458 = vrot.slane %v454, %v457
        %460 = vbcast.lane.b32.xlu0 %v458, 256
        %v461 = vpop.permute.xlu0 %460
        %s463 = sor.u32 256, 8
        %464 = vbcast.lane.b32.xlu0 %v458, %s463
        %v465 = vpop.permute.xlu0 %464
        %v466 = vlaneseq
        %v467 = vshrl.u32 %v466, 7
        %v468 = vsub.s32 1, %v467
        %v469 = vrot.slane %v454, %v468
        %471 = vbcast.lane.b32.xlu0 %v469, 256
        %v472 = vpop.permute.xlu0 %471
        %s474 = sor.u32 256, 8
        %475 = vbcast.lane.b32.xlu0 %v469, %s474
        %v476 = vpop.permute.xlu0 %475
        %v477 = vmul.f32 %v461, %v201
        %v478 = vmul.f32 %v465, %v202
        %v479 = vmul.f32 %v472, %v203
        %v480 = vmul.f32 %v476, %v204
        %481 = vst.msk [vmem:[%s177] sm:$0xff] %vm205, %v477
        %482 = vst.msk [vmem:[%s177 + $0x8] sm:$0xff] %vm205, %v478
        %483 = vst.msk [vmem:[%s177 + $0x10] sm:$0xff] %vm205, %v479
        %484 = vst.msk [vmem:[%s177 + $0x18] sm:$0xff] %vm205, %v480
        %s485 = sand.u32 %s90, 1
        %s486 = sand.u32 %s90, 1
        %s487 = smul.addr %s486, 32
        %s488 = scalar_lea.vmem [#allocation2], %s487
        // Predicated region
        $region33: #{channel_attention.1} parent=31 // pred_check
          %p489 = pneg %p100
        $region34: #{channel_attention.1} parent=31 // pred_check_branch
          %491 = sbr.rel (%p489) target = $region36
        $region35: #{channel_attention.1} parent=31 // pred_region
          %s492 = smul.u32 2, %s14
          %s493 = ssub.s32 3, %s492
          %p494 = scmp.lt.s32.totalorder %s493, 2
          %s495 = scalar_select %p494, %s493, 2
          %s496 = smul.u32 128, %s495
          %s497 = smul.u32 %s496, 2
          %p498 = scmp.ne.s32.totalorder 0, %s497
          %s499 = smul.addr %s492, 2
          %s500 = smul.addr %s499, 8
          %s501 = scalar_lea.vmem %s3, %s500
          %s502 = smul.u32 %s495, 2
          // Predicated region
          $region37: #{channel_attention.1} parent=35 // pred_check
            %p503 = pneg %p498
          $region38: #{channel_attention.1} parent=35 // pred_check_branch
            %505 = sbr.rel (%p503) target = $region40
          $region39: #{channel_attention.1} parent=35 // pred_region
            // Predicated region
            $region41: #{channel_attention.1} parent=39 // pred_check
              _
            $region42: #{channel_attention.1} parent=39 // pred_check_branch
              %507 = sbr.rel (0) target = $region44
            $region43: #{channel_attention.1} parent=39 // pred_region
              // Predicated region
              $region63: #{channel_attention.1} parent=43 // pred_check
                _
              $region64: #{channel_attention.1} parent=43 // pred_check_branch
                %563 = sbr.rel (0) target = $region66
              $region65: #{channel_attention.1} parent=43 // pred_region
                %s564 = sshrl.u32 %s502, 2
                // While loop
                $region67: #{channel_attention.1} parent=65 // loop_pre_header
                  _
                $region68: #{channel_attention.1} parent=65 // loop_header
                  %s566 = sphi 0, %s568
                  %p567 = scmp.ge.s32.totalorder %s566, %s564
                  %s571 = sphi 0, %s584
                  %s572 = sphi %s488, %s587
                  %s573 = sphi %s501, %s588
                $region69: #{channel_attention.1} parent=65 // loop_header_branch
                  %570 = sbr.rel (%p567) target = $region73
                $region70: #{channel_attention.1} parent=65 // loop_body
                  %v574 = vld [vmem:[%s572] sm:$0xff]
                  %575 = vst [vmem:[%s573] sm:$0xff] %v574
                  %v576 = vld [vmem:[%s572 + $0x8] sm:$0xff]
                  %577 = vst [vmem:[%s573 + $0x8] sm:$0xff] %v576
                  %v578 = vld [vmem:[%s572 + $0x10] sm:$0xff]
                  %579 = vst [vmem:[%s573 + $0x10] sm:$0xff] %v578
                  %v580 = vld [vmem:[%s572 + $0x18] sm:$0xff]
                  %581 = vst [vmem:[%s573 + $0x18] sm:$0xff] %v580
                  %s582 = sadd.s32 1, %s571
                  %p583 = scmp.ge.s32.totalorder %s582, %s564
                  %s584 = scalar_select %p583, 0, %s582
                  %s585 = smul.u32 %s584, 32
                  %s586 = smul.u32 %s584, 32
                  %s587 = scalar_lea.vmem %s488, %s585 [#allocation2]
                  %s588 = scalar_lea.vmem %s501, %s586
                $region71: #{channel_attention.1} parent=65 // loop_footer
                  %s568 = sadd.s32 %s566, 1
                $region72: #{channel_attention.1} parent=65 // loop_footer_branch
                  %565 = sbr.rel target = $region68
                $region73: #{channel_attention.1} parent=65 // loop_exit
                  _
                %s589 = sshrl.u32 %s502, 2
                %s590 = sand.u32 %s502, 3
                %s591 = smul.u32 %s589, 4
                %s592 = smul.u32 8, %s591
                %s593 = scalar_lea.vmem %s488, %s592 [#allocation2]
                %s594 = smul.u32 8, %s591
                %s595 = scalar_lea.vmem %s501, %s594
                // While loop
                $region74: #{channel_attention.1} parent=65 // loop_pre_header
                  _
                $region75: #{channel_attention.1} parent=65 // loop_header
                  %s597 = sphi 0, %s599
                  %p598 = scmp.ge.s32.totalorder %s597, %s590
                  %s602 = sphi 0, %s609
                  %s603 = sphi %s593, %s612
                  %s604 = sphi %s595, %s613
                $region76: #{channel_attention.1} parent=65 // loop_header_branch
                  %601 = sbr.rel (%p598) target = $region80
                $region77: #{channel_attention.1} parent=65 // loop_body
                  %v605 = vld [vmem:[%s603] sm:$0xff]
                  %606 = vst [vmem:[%s604] sm:$0xff] %v605
                  %s607 = sadd.s32 1, %s602
                  %p608 = scmp.ge.s32.totalorder %s607, %s590
                  %s609 = scalar_select %p608, 0, %s607
                  %s610 = smul.u32 %s609, 8
                  %s611 = smul.u32 %s609, 8
                  %s612 = scalar_lea.vmem %s593, %s610 [#allocation2]
                  %s613 = scalar_lea.vmem %s595, %s611
                $region78: #{channel_attention.1} parent=65 // loop_footer
                  %s599 = sadd.s32 %s597, 1
                $region79: #{channel_attention.1} parent=65 // loop_footer_branch
                  %596 = sbr.rel target = $region75
                $region80: #{channel_attention.1} parent=65 // loop_exit
                  _
              $region66: #{channel_attention.1} parent=43 // pred_fallthru
                _
              // Predicated region
              $region81: #{channel_attention.1} parent=43 // pred_check
                _
              $region82: #{channel_attention.1} parent=43 // pred_check_branch
                %615 = sbr.rel target = $region84
              $region83: #{channel_attention.1} parent=43 // pred_region
                _
              $region84: #{channel_attention.1} parent=43 // pred_fallthru
                _
            $region44: #{channel_attention.1} parent=39 // pred_fallthru
              _
            // Predicated region
            $region45: #{channel_attention.1} parent=39 // pred_check
              _
            $region46: #{channel_attention.1} parent=39 // pred_check_branch
              %509 = sbr.rel target = $region48
            $region47: #{channel_attention.1} parent=39 // pred_region
              %s511 = ssub.s32 256, 1
              %s512 = sshrl.u32 %s502, 2
              // While loop
              $region49: #{channel_attention.1} parent=47 // loop_pre_header
                _
              $region50: #{channel_attention.1} parent=47 // loop_header
                %s514 = sphi 0, %s516
                %p515 = scmp.ge.s32.totalorder %s514, %s512
                %s519 = sphi 0, %s532
                %s520 = sphi %s488, %s535
                %s521 = sphi %s501, %s536
              $region51: #{channel_attention.1} parent=47 // loop_header_branch
                %518 = sbr.rel (%p515) target = $region55
              $region52: #{channel_attention.1} parent=47 // loop_body
                %v522 = vld [vmem:[%s520] sm:%s511]
                %523 = vst [vmem:[%s521] sm:%s511] %v522
                %v524 = vld [vmem:[%s520 + $0x8] sm:%s511]
                %525 = vst [vmem:[%s521 + $0x8] sm:%s511] %v524
                %v526 = vld [vmem:[%s520 + $0x10] sm:%s511]
                %527 = vst [vmem:[%s521 + $0x10] sm:%s511] %v526
                %v528 = vld [vmem:[%s520 + $0x18] sm:%s511]
                %529 = vst [vmem:[%s521 + $0x18] sm:%s511] %v528
                %s530 = sadd.s32 1, %s519
                %p531 = scmp.ge.s32.totalorder %s530, %s512
                %s532 = scalar_select %p531, 0, %s530
                %s533 = smul.u32 %s532, 32
                %s534 = smul.u32 %s532, 32
                %s535 = scalar_lea.vmem %s488, %s533 [#allocation2]
                %s536 = scalar_lea.vmem %s501, %s534
              $region53: #{channel_attention.1} parent=47 // loop_footer
                %s516 = sadd.s32 %s514, 1
              $region54: #{channel_attention.1} parent=47 // loop_footer_branch
                %513 = sbr.rel target = $region50
              $region55: #{channel_attention.1} parent=47 // loop_exit
                _
              %s537 = sshrl.u32 %s502, 2
              %s538 = sand.u32 %s502, 3
              %s539 = smul.u32 %s537, 4
              %s540 = smul.u32 8, %s539
              %s541 = scalar_lea.vmem %s488, %s540 [#allocation2]
              %s542 = smul.u32 8, %s539
              %s543 = scalar_lea.vmem %s501, %s542
              // While loop
              $region56: #{channel_attention.1} parent=47 // loop_pre_header
                _
              $region57: #{channel_attention.1} parent=47 // loop_header
                %s545 = sphi 0, %s547
                %p546 = scmp.ge.s32.totalorder %s545, %s538
                %s550 = sphi 0, %s557
                %s551 = sphi %s541, %s560
                %s552 = sphi %s543, %s561
              $region58: #{channel_attention.1} parent=47 // loop_header_branch
                %549 = sbr.rel (%p546) target = $region62
              $region59: #{channel_attention.1} parent=47 // loop_body
                %v553 = vld [vmem:[%s551] sm:%s511]
                %554 = vst [vmem:[%s552] sm:%s511] %v553
                %s555 = sadd.s32 1, %s550
                %p556 = scmp.ge.s32.totalorder %s555, %s538
                %s557 = scalar_select %p556, 0, %s555
                %s558 = smul.u32 %s557, 8
                %s559 = smul.u32 %s557, 8
                %s560 = scalar_lea.vmem %s541, %s558 [#allocation2]
                %s561 = scalar_lea.vmem %s543, %s559
              $region60: #{channel_attention.1} parent=47 // loop_footer
                %s547 = sadd.s32 %s545, 1
              $region61: #{channel_attention.1} parent=47 // loop_footer_branch
                %544 = sbr.rel target = $region57
              $region62: #{channel_attention.1} parent=47 // loop_exit
                _
            $region48: #{channel_attention.1} parent=39 // pred_fallthru
              _
          $region40: #{channel_attention.1} parent=35 // pred_fallthru
            _
          %616 = vnop
        $region36: #{channel_attention.1} parent=31 // pred_fallthru
          _
      $region32: #{channel_attention.1} parent=5 // pred_fallthru
        _
      %p617 = scmp.le.s32.totalorder 2, %s9
      // Predicated region
      $region85: #{channel_attention.1} parent=5 // pred_check
        %p618 = pneg %p617
      $region86: #{channel_attention.1} parent=5 // pred_check_branch
        %620 = sbr.rel (%p618) target = $region88
      $region87: #{channel_attention.1} parent=5 // pred_region
        %s621 = ssub.s32 %s9, 2
        // Predicated region
        $region89: #{channel_attention.1} parent=87 // pred_check
          %p622 = pneg %p106
        $region90: #{channel_attention.1} parent=87 // pred_check_branch
          %624 = sbr.rel (%p622) target = $region92
        $region91: #{channel_attention.1} parent=87 // pred_region
          %s625 = sand.u32 %s91, 1
          %s626 = sand.u32 %s91, 1
          %s627 = smul.addr %s626, 32
          %s628 = scalar_lea.vmem [#allocation2], %s627
        $region92: #{channel_attention.1} parent=87 // pred_fallthru
          _
      $region88: #{channel_attention.1} parent=5 // pred_fallthru
        _
    $region6: #{channel_attention.1} parent=1 // loop_footer
      %s13 = sadd.s32 1, %s9
    $region7: #{channel_attention.1} parent=1 // loop_footer_branch
      %8 = sbr.rel target = $region3
    $region8: #{channel_attention.1} parent=1 // loop_exit
      _

</llo_original>
